<compile_context>
chip_gen: v6e
topology: v6e:2x2x1
jax: 0.10.0
libtpu: 0.0.40
codegen_flags: <defaults>
</compile_context>

<pallas_src>
import jax
import jax.numpy as jnp
from jax import lax
from jax.experimental import pallas as pl
from jax.experimental.pallas import tpu as pltpu


def _round_up(x: int, m: int) -> int:
    return ((x + m - 1) // m) * m


def _cdiv(a: int, b: int) -> int:
    return -(-a // b)


_TARGET_STEP_BYTES = 4 << 20   # stream ~4 MiB of input per grid step
_MAX_WORKSET_BYTES = 24 << 20  # double-buffered input tiles must stay under this


def _num_tensorcores() -> int:
    """Best-effort TensorCores-per-chip detection (2 on v7x, else 1)."""
    try:
        info = pltpu.get_tpu_info()
    except Exception:
        return 1
    for attr in ("num_cores", "num_tensorcores", "tensorcore_count",
                 "cores_per_chip"):
        v = getattr(info, attr, None)
        if isinstance(v, int) and v in (1, 2):
            return v
    return 1


def _make_gram_kernel(b, d, tile_d, nt_per, ncore):
    """Kernel accumulating G = x @ x.T over feature tiles (grid axis 1)."""
    needs_mask = (ncore * nt_per * tile_d) != d  # ragged last tile / OOB steps

    def kernel(x_ref, g_ref):
        i = pl.program_id(1)

        @pl.when(i == 0)
        def _():
            g_ref[...] = jnp.zeros_like(g_ref)

        x = x_ref[...]                              # (B, TILE_D), native dtype
        if needs_mask:
            # Mask columns >= d by *logical* index — Pallas leaves the
            # out-of-bounds tail of a ragged block undefined.
            col0 = (pl.program_id(0) * nt_per + i) * tile_d
            cols = col0 + lax.broadcasted_iota(jnp.int32, (b, tile_d), 1)
            x = jnp.where(cols < d, x, jnp.zeros_like(x))

        # x @ x.T — contraction over the lane axis feeds the MXU; f32 accum.
        dn = (((1,), (1,)), ((), ()))
        g_ref[...] += lax.dot_general(x, x, dn,
                                      preferred_element_type=jnp.float32)

    return kernel


def _gram(x, ncore, tile_d_override=None):
    """Raw (uncentered) Gram matrix G = x @ x.T via a tiled Pallas reduction."""
    b, d = x.shape
    itemsize = x.dtype.itemsize

    if tile_d_override is not None:
        tile_d = max(128, _round_up(min(tile_d_override, _round_up(d, 128)), 128))
    else:
        want = max(128, (_TARGET_STEP_BYTES // (b * itemsize)) // 128 * 128)
        cap = max(128, (_MAX_WORKSET_BYTES // (2 * b * itemsize)) // 128 * 128)
        tile_d = max(128, min(_round_up(d, 128), want, cap))

    n_tiles = _cdiv(d, tile_d)
    ncore = ncore if n_tiles >= 2 else 1
    nt_per = _cdiv(n_tiles, ncore)

    # Clamp block index so a core's trailing (fully out-of-range) steps reload
    # a valid tile; their contribution is zeroed by the in-kernel mask.
    if ncore * nt_per > n_tiles:
        in_map = lambda c, i: (0, jnp.minimum(c * nt_per + i, n_tiles - 1))
    else:
        in_map = lambda c, i: (0, c * nt_per + i)

    kernel = _make_gram_kernel(b, d, tile_d, nt_per, ncore)

    cost = pl.CostEstimate(
        flops=2 * b * b * d,
        transcendentals=0,
        bytes_accessed=b * d * itemsize + ncore * b * b * 4,
    )
    dim_sem = (pltpu.CORE_PARALLEL if ncore > 1 else pltpu.PARALLEL,
               pltpu.ARBITRARY)

    g_parts = pl.pallas_call(
        kernel,
        out_shape=jax.ShapeDtypeStruct((ncore, b, b), jnp.float32),
        grid_spec=pltpu.PrefetchScalarGridSpec(
            num_scalar_prefetch=0,
            grid=(ncore, nt_per),
            in_specs=[pl.BlockSpec((b, tile_d), in_map)],
            out_specs=pl.BlockSpec((pl.Squeezed(), b, b),
                                   lambda c, i: (c, 0, 0)),
        ),
        compiler_params=pltpu.CompilerParams(
            dimension_semantics=dim_sem,
            vmem_limit_bytes=32 << 20,   # safe scoped limit on v5e/v6e/v7x
        ),
        cost_estimate=cost,
    )(x)

    return jnp.sum(g_parts, axis=0) if ncore > 1 else g_parts[0]


def _center_and_normalize(g):
    """Apply column-mean centering + per-row L2 normalization in Gram space."""
    r = jnp.mean(g, axis=1, keepdims=True)       # (B, 1) row means
    q = jnp.mean(r)                              # grand mean
    g_c = g - r - r.T + q                        # H G H,  H = I - (1/B) 11^T
    diag = jnp.maximum(jnp.diagonal(g_c), 0.0)   # ||x_c[i]||^2
    inv_n = 1.0 / (jnp.sqrt(diag) + 1e-6)
    return g_c * (inv_n[:, None] * inv_n[None, :])


def _diff_loss_impl(input1, input2, tile_d=None):
    b = input1.shape[0]
    x1 = input1.reshape(b, -1)   # keep native dtype — no extra HBM pass
    x2 = input2.reshape(b, -1)
    d1, d2 = x1.shape[1], x2.shape[1]

    ncore = _num_tensorcores()
    g1 = _gram(x1, ncore, tile_d)
    g2 = _gram(x2, ncore, tile_d)

    g1n = _center_and_normalize(g1)
    g2n = _center_and_normalize(g2)
    return jnp.sum(g1n * g2n) / (d1 * d2)


# Jit the whole thing (pallas calls + O(B^2) finalisation) as one function.
diff_loss = jax.jit(_diff_loss_impl, static_argnames=("tile_d",))


def _diff_loss_ref(input1, input2):
    """Pure-JAX reference: literal transcription of the PyTorch module."""
    b = input1.shape[0]
    x1 = input1.reshape(b, -1).astype(jnp.float32)
    x2 = input2.reshape(b, -1).astype(jnp.float32)
    x1 = x1 - jnp.mean(x1, axis=0, keepdims=True)
    x2 = x2 - jnp.mean(x2, axis=0, keepdims=True)
    x1 = x1 / (jnp.linalg.norm(x1, axis=1, keepdims=True) + 1e-6)
    x2 = x2 / (jnp.linalg.norm(x2, axis=1, keepdims=True) + 1e-6)
    return jnp.mean((x1.T @ x2) ** 2)


if __name__ == "__main__":
    key = jax.random.PRNGKey(0)
    k1, k2, k3, k4, k5, k6 = jax.random.split(key, 6)

    cases = [
        # (input1, input2, tile_d override)
        (jax.random.normal(k1, (2, 4, 16, 16), jnp.float32),
         jax.random.normal(k2, (2, 4, 16, 16), jnp.float32), None),
        # forces a multi-tile pipelined reduction over the feature axis
        (jax.random.normal(k3, (8, 8, 16, 16), jnp.float32),
         jax.random.normal(k4, (8, 8, 16, 16), jnp.float32), 512),
        # mismatched, non-128-aligned feature dims -> ragged last tile + mask
        (jax.random.normal(k5, (4, 6, 8, 8), jnp.float32),
         jax.random.normal(k6, (4, 4, 10, 10), jnp.float32), 128),
    ]

    for a, c, td in cases:
        loss = diff_loss(a, c, tile_d=td)
        jax.block_until_ready(loss)
        ref = _diff_loss_ref(a, c)
        assert jnp.allclose(loss, ref, rtol=2e-3, atol=1e-7), (loss, ref)

    print("KERNEL_OK")
</pallas_src>

<mosaic_0001>
module attributes {stable_mosaic.version = 11 : i64} {
  func.func @kernel(%arg0: i32, %arg1: i32, %arg2: memref<2x1024xf32, #tpu.memory_space<vmem>>, %arg3: memref<1x2x2xf32, #tpu.memory_space<vmem>>) attributes {dimension_semantics = [#tpu.dimension_semantics<parallel>, #tpu.dimension_semantics<arbitrary>], iteration_bounds = array<i64: 1, 1>, scalar_prefetch = 0 : i64, scratch_operands = 0 : i64, tpu.core_type = #tpu.core_type<tc>, window_params = [{transform_indices = @transform_0, window_bounds = array<i64: 2, 1024>}, {transform_indices = @transform_1, window_bounds = array<i64: 1, 2, 2>}]} {
    %c0_i32 = arith.constant 0 : i32
    %0 = arith.cmpi eq, %arg1, %c0_i32 : i32
    %1 = arith.extui %0 : i1 to i32
    %c0_i32_0 = arith.constant 0 : i32
    %2 = arith.cmpi ne, %1, %c0_i32_0 : i32
    scf.if %2 {
      %cst_8 = arith.constant 0.000000e+00 : f32
      %11 = vector.broadcast %cst_8 : f32 to vector<2x2xf32>
      %c0_9 = arith.constant 0 : index
      %c0_10 = arith.constant 0 : index
      %c0_11 = arith.constant 0 : index
      %12 = vector.load %arg3[%c0_9, %c0_10, %c0_11] : memref<1x2x2xf32, #tpu.memory_space<vmem>>, vector<1x2x2xf32>
      %13 = vector.shape_cast %12 : vector<1x2x2xf32> to vector<2x2xf32>
      %14 = vector.shape_cast %11 : vector<2x2xf32> to vector<1x2x2xf32>
      tpu.vector_store %arg3[%c0_9, %c0_10, %c0_11], %14 {strides = array<i32>} : memref<1x2x2xf32, #tpu.memory_space<vmem>>, vector<1x2x2xf32>,
    } else {
    }
    %c0 = arith.constant 0 : index
    %c0_1 = arith.constant 0 : index
    %3 = vector.load %arg2[%c0, %c0_1] : memref<2x1024xf32, #tpu.memory_space<vmem>>, vector<2x1024xf32>
    %c0_2 = arith.constant 0 : index
    %c0_3 = arith.constant 0 : index
    %c0_4 = arith.constant 0 : index
    %4 = vector.load %arg3[%c0_2, %c0_3, %c0_4] : memref<1x2x2xf32, #tpu.memory_space<vmem>>, vector<1x2x2xf32>
    %5 = vector.shape_cast %4 : vector<1x2x2xf32> to vector<2x2xf32>
    %cst = arith.constant dense<0.000000e+00> : vector<2x2xf32>
    %6 = tpu.matmul %3, %3, %cst {dimension_numbers = #tpu.dot_dimension_numbers<[1], [1], [0], [0], [0, 0, 1, 0], [], []>} : vector<2x1024xf32>, vector<2x1024xf32>, vector<2x2xf32> -> vector<2x2xf32>
    %7 = arith.addf %5, %6 : vector<2x2xf32>
    %c0_5 = arith.constant 0 : index
    %c0_6 = arith.constant 0 : index
    %c0_7 = arith.constant 0 : index
    %8 = vector.load %arg3[%c0_5, %c0_6, %c0_7] : memref<1x2x2xf32, #tpu.memory_space<vmem>>, vector<1x2x2xf32>
    %9 = vector.shape_cast %8 : vector<1x2x2xf32> to vector<2x2xf32>
    %10 = vector.shape_cast %7 : vector<2x2xf32> to vector<1x2x2xf32>
    tpu.vector_store %arg3[%c0_5, %c0_6, %c0_7], %10 {strides = array<i32>} : memref<1x2x2xf32, #tpu.memory_space<vmem>>, vector<1x2x2xf32>,
    return
  }
  func.func @transform_0(%arg0: i32, %arg1: i32) -> (i32, i32) {
    %c1_i32 = arith.constant 1 : i32
    %0 = arith.muli %arg0, %c1_i32 : i32
    %1 = arith.addi %0, %arg1 : i32
    %c0_i32 = arith.constant 0 : i32
    %c0_i32_0 = arith.constant 0 : i32
    return %c0_i32, %1 : i32, i32
  }
  func.func @transform_1(%arg0: i32, %arg1: i32) -> (i32, i32, i32) {
    %c0_i32 = arith.constant 0 : i32
    %c0_i32_0 = arith.constant 0 : i32
    %c0_i32_1 = arith.constant 0 : i32
    return %arg0, %c0_i32, %c0_i32_0 : i32, i32, i32
  }
}

</mosaic_0001>

<llo_original>
// kernel: _diff_loss_impl.2
$region0: #{_diff_loss_impl.2}
  #allocation0 [shape = 'u32[]', space=smem, size = 0x4, offset = 0x4, fixed_abs, tag = 'smem constant byte address 0x4 - core index']
  #allocation1 [shape = 'u32[144,128]{1,0:T(1,128)}', space=vmem, size = 0x12000, scoped, tag = 'internal scratch']
  %s0 = inlined_call_operand.vmem [shape: f32[2,1024], index: 0, kind: input, shape index: {}]
  %s1 = inlined_call_operand.vmem [shape: f32[1,2,2], index: 1, kind: output, shape index: {}]
  %s2 = sld [smem:[#allocation0]]
  $region18: #{_diff_loss_impl.2} parent=0
    _
  %s4 = ssub.s32 1, %s2
  %s5 = scalar_select 0, %s4, %s2
  // Predicated region
  $region2: #{_diff_loss_impl.2} parent=0 // pred_check
    _
  $region3: #{_diff_loss_impl.2} parent=0 // pred_check_branch
    %7 = sbr.rel (0) target = $region5
  $region4: #{_diff_loss_impl.2} parent=0 // pred_region
    %s8 = sadd.s32 0, 0
    %s9 = smul.u32 8, %s8
    %p10 = scmp.lt.s32.totalorder %s9, 7
    %s11 = scalar_select %p10, %s9, 7
    %s12 = smul.addr %s11, 2
    %s13 = scalar_lea.vmem %s0, %s12
    %s14 = sadd.s32 0, 0
    %s15 = smul.u32 8, %s14
  $region5: #{_diff_loss_impl.2} parent=0 // pred_fallthru
    _
  %s16 = sadd.s32 0, 0
  %s17 = smul.u32 8, %s16
  %p18 = scmp.lt.s32.totalorder %s17, 7
  %s19 = scalar_select %p18, %s17, 7
  %s20 = smul.addr %s19, 2
  %s21 = scalar_lea.vmem %s0, %s20
  %s22 = sadd.s32 0, 0
  %s23 = smul.u32 8, %s22
  %p24 = scmp.lt.s32.totalorder %s23, 7
  %s25 = scalar_select %p24, %s23, 7
  %s26 = smul.addr %s25, 2
  %s27 = scalar_lea.vmem %s0, %s26
  %s28 = sadd.s32 0, 0
  %s29 = smul.u32 8, %s28
  %p30 = scmp.eq.s32.totalorder 0, 0
  // Predicated region
  $region6: #{_diff_loss_impl.2} parent=0 // pred_check
    %p31 = pneg %p30
  $region7: #{_diff_loss_impl.2} parent=0 // pred_check_branch
    %33 = sbr.rel (%p31) target = $region9
  $region8: #{_diff_loss_impl.2} parent=0 // pred_region
    %vm34 = vcmask 9216
    %35 = vst.msk [vmem:[%s1] sm:$0x3] %vm34, 0.0
  $region9: #{_diff_loss_impl.2} parent=0 // pred_fallthru
    _
  %v36 = vld [vmem:[%s27] sm:$0xff]
  %v37 = vld [vmem:[%s27 + $0x8] sm:$0xff]
  %v38 = vld [vmem:[%s1] sm:$0x3]
  %v41 = vcombine.high %v36, %v36
  %v43 = vunpack.c.l.s4 1983009808
  %v44 = vunpack.c.0.s8 %v43
  %v45 = vlaneseq
  %v46 = vshrl.u32 %v45, 7
  %v47 = vsub.s32 %v44, %v46
  %v48 = vrot.slane %v36, %v47
  %v50 = vunpack.c.l.s4 1983009808
  %v51 = vunpack.c.0.s8 %v50
  %v52 = vlaneseq
  %v53 = vshrl.u32 %v52, 7
  %v54 = vsub.s32 %v51, %v53
  %v55 = vrot.slane %v41, %v54
  %v56 = vcombine.high %v48, %v48
  %v57 = vcombine.high %v55, %v55
  %v58 = vcombine.high %v37, %v37
  %v60 = vunpack.c.l.s4 1983009808
  %v61 = vunpack.c.0.s8 %v60
  %v62 = vlaneseq
  %v63 = vshrl.u32 %v62, 7
  %v64 = vsub.s32 %v61, %v63
  %v65 = vrot.slane %v37, %v64
  %v67 = vunpack.c.l.s4 1983009808
  %v68 = vunpack.c.0.s8 %v67
  %v69 = vlaneseq
  %v70 = vshrl.u32 %v69, 7
  %v71 = vsub.s32 %v68, %v70
  %v72 = vrot.slane %v58, %v71
  %v73 = vcombine.high %v65, %v65
  %v74 = vcombine.high %v72, %v72
  %83 = vmatprep.subr.mxu0 0.0
  %84 = vmatpush1.xpose.msra.mxu0 0.0
  %85 = vmatprep.subr.mxu0 0.0
  %86 = vmatpush1.xpose.msra.mxu0 0.0
  %87 = vmatprep.subr.mxu0 0.0
  %88 = vmatpush1.xpose.msra.mxu0 0.0
  %89 = vmatprep.subr.mxu0 0.0
  %90 = vmatpush1.xpose.msra.mxu0 0.0
  %91 = vmatprep.subr.mxu0 0.0
  %92 = vmatpush1.xpose.msra.mxu0 0.0
  %93 = vmatprep.subr.mxu0 0.0
  %94 = vmatpush1.xpose.msra.mxu0 0.0
  %95 = vmatprep.subr.mxu0 0.0
  %96 = vmatpush1.xpose.msra.mxu0 0.0
  %97 = vmatprep.subr.mxu0 0.0
  %98 = vmatpush1.xpose.msra.mxu0 0.0
  %99 = vmatprep.subr.mxu0 0.0
  %100 = vmatpush1.xpose.msra.mxu0 0.0
  %101 = vmatprep.subr.mxu0 0.0
  %102 = vmatpush1.xpose.msra.mxu0 0.0
  %103 = vmatprep.subr.mxu0 0.0
  %104 = vmatpush1.xpose.msra.mxu0 0.0
  %105 = vmatprep.subr.mxu0 0.0
  %106 = vmatpush1.xpose.msra.mxu0 0.0
  %107 = vmatprep.subr.mxu0 0.0
  %108 = vmatpush1.xpose.msra.mxu0 0.0
  %109 = vmatprep.subr.mxu0 0.0
  %110 = vmatpush1.xpose.msra.mxu0 0.0
  %111 = vmatprep.subr.mxu0 0.0
  %112 = vmatpush1.xpose.msra.mxu0 0.0
  %113 = vmatprep.subr.mxu0 %v56
  %114 = vmatpush1.xpose.msra.mxu0 %v48
  %115 = vmatprep.subr.mxu0 0.0
  %116 = vmatpush2.xpose.msra.mxu0 0.0
  %117 = vmatprep.subr.mxu0 0.0
  %118 = vmatpush2.xpose.msra.mxu0 0.0
  %119 = vmatprep.subr.mxu0 0.0
  %120 = vmatpush2.xpose.msra.mxu0 0.0
  %121 = vmatprep.subr.mxu0 0.0
  %122 = vmatpush2.xpose.msra.mxu0 0.0
  %123 = vmatprep.subr.mxu0 0.0
  %124 = vmatpush2.xpose.msra.mxu0 0.0
  %125 = vmatprep.subr.mxu0 0.0
  %126 = vmatpush2.xpose.msra.mxu0 0.0
  %127 = vmatprep.subr.mxu0 0.0
  %128 = vmatpush2.xpose.msra.mxu0 0.0
  %129 = vmatprep.subr.mxu0 0.0
  %130 = vmatpush2.xpose.msra.mxu0 0.0
  %131 = vmatprep.subr.mxu0 0.0
  %132 = vmatpush2.xpose.msra.mxu0 0.0
  %133 = vmatprep.subr.mxu0 0.0
  %134 = vmatpush2.xpose.msra.mxu0 0.0
  %135 = vmatprep.subr.mxu0 0.0
  %136 = vmatpush2.xpose.msra.mxu0 0.0
  %137 = vmatprep.subr.mxu0 0.0
  %138 = vmatpush2.xpose.msra.mxu0 0.0
  %139 = vmatprep.subr.mxu0 0.0
  %140 = vmatpush2.xpose.msra.mxu0 0.0
  %141 = vmatprep.subr.mxu0 0.0
  %142 = vmatpush2.xpose.msra.mxu0 0.0
  %143 = vmatprep.subr.mxu0 0.0
  %144 = vmatpush2.xpose.msra.mxu0 0.0
  %145 = vmatprep.subr.mxu0 0.0
  %146 = vmatpush2.xpose.msra.mxu0 0.0
  %147 = vmatprep.mubr.f32.mxu0 %v56
  %148 = vmatmul.mubr.f32.gmra.mxu0 %v48
  %v149 = vpop.f32.mrf.mxu0
  %v150 = vadd.f32 0.0, %v149
  %v151 = vpop.f32.mrf.mxu0
  %152 = vdwg.mxu0
  %153 = vmatprep.subr.mxu0 0.0
  %154 = vmatpush1.xpose.msra.mxu0 0.0
  %155 = vmatprep.subr.mxu0 0.0
  %156 = vmatpush1.xpose.msra.mxu0 0.0
  %157 = vmatprep.subr.mxu0 0.0
  %158 = vmatpush1.xpose.msra.mxu0 0.0
  %159 = vmatprep.subr.mxu0 0.0
  %160 = vmatpush1.xpose.msra.mxu0 0.0
  %161 = vmatprep.subr.mxu0 0.0
  %162 = vmatpush1.xpose.msra.mxu0 0.0
  %163 = vmatprep.subr.mxu0 0.0
  %164 = vmatpush1.xpose.msra.mxu0 0.0
  %165 = vmatprep.subr.mxu0 0.0
  %166 = vmatpush1.xpose.msra.mxu0 0.0
  %167 = vmatprep.subr.mxu0 0.0
  %168 = vmatpush1.xpose.msra.mxu0 0.0
  %169 = vmatprep.subr.mxu0 0.0
  %170 = vmatpush1.xpose.msra.mxu0 0.0
  %171 = vmatprep.subr.mxu0 0.0
  %172 = vmatpush1.xpose.msra.mxu0 0.0
  %173 = vmatprep.subr.mxu0 0.0
  %174 = vmatpush1.xpose.msra.mxu0 0.0
  %175 = vmatprep.subr.mxu0 0.0
  %176 = vmatpush1.xpose.msra.mxu0 0.0
  %177 = vmatprep.subr.mxu0 0.0
  %178 = vmatpush1.xpose.msra.mxu0 0.0
  %179 = vmatprep.subr.mxu0 0.0
  %180 = vmatpush1.xpose.msra.mxu0 0.0
  %181 = vmatprep.subr.mxu0 0.0
  %182 = vmatpush1.xpose.msra.mxu0 0.0
  %183 = vmatprep.subr.mxu0 %v57
  %184 = vmatpush1.xpose.msra.mxu0 %v55
  %185 = vmatprep.subr.mxu0 0.0
  %186 = vmatpush2.xpose.msra.mxu0 0.0
  %187 = vmatprep.subr.mxu0 0.0
  %188 = vmatpush2.xpose.msra.mxu0 0.0
  %189 = vmatprep.subr.mxu0 0.0
  %190 = vmatpush2.xpose.msra.mxu0 0.0
  %191 = vmatprep.subr.mxu0 0.0
  %192 = vmatpush2.xpose.msra.mxu0 0.0
  %193 = vmatprep.subr.mxu0 0.0
  %194 = vmatpush2.xpose.msra.mxu0 0.0
  %195 = vmatprep.subr.mxu0 0.0
  %196 = vmatpush2.xpose.msra.mxu0 0.0
  %197 = vmatprep.subr.mxu0 0.0
  %198 = vmatpush2.xpose.msra.mxu0 0.0
  %199 = vmatprep.subr.mxu0 0.0
  %200 = vmatpush2.xpose.msra.mxu0 0.0
  %201 = vmatprep.subr.mxu0 0.0
  %202 = vmatpush2.xpose.msra.mxu0 0.0
  %203 = vmatprep.subr.mxu0 0.0
  %204 = vmatpush2.xpose.msra.mxu0 0.0
  %205 = vmatprep.subr.mxu0 0.0
  %206 = vmatpush2.xpose.msra.mxu0 0.0
  %207 = vmatprep.subr.mxu0 0.0
  %208 = vmatpush2.xpose.msra.mxu0 0.0
  %209 = vmatprep.subr.mxu0 0.0
  %210 = vmatpush2.xpose.msra.mxu0 0.0
  %211 = vmatprep.subr.mxu0 0.0
  %212 = vmatpush2.xpose.msra.mxu0 0.0
  %213 = vmatprep.subr.mxu0 0.0
  %214 = vmatpush2.xpose.msra.mxu0 0.0
  %215 = vmatprep.subr.mxu0 0.0
  %216 = vmatpush2.xpose.msra.mxu0 0.0
  %217 = vmatprep.mubr.f32.mxu0 %v57
  %218 = vmatmul.mubr.f32.gmra.mxu0 %v55
  %v219 = vpop.f32.mrf.mxu0
  %v220 = vadd.f32 %v150, %v219
  %v221 = vpop.f32.mrf.mxu0
  %222 = vdwg.mxu0
  %223 = vmatprep.subr.mxu0 0.0
  %224 = vmatpush1.xpose.msra.mxu0 0.0
  %225 = vmatprep.subr.mxu0 0.0
  %226 = vmatpush1.xpose.msra.mxu0 0.0
  %227 = vmatprep.subr.mxu0 0.0
  %228 = vmatpush1.xpose.msra.mxu0 0.0
  %229 = vmatprep.subr.mxu0 0.0
  %230 = vmatpush1.xpose.msra.mxu0 0.0
  %231 = vmatprep.subr.mxu0 0.0
  %232 = vmatpush1.xpose.msra.mxu0 0.0
  %233 = vmatprep.subr.mxu0 0.0
  %234 = vmatpush1.xpose.msra.mxu0 0.0
  %235 = vmatprep.subr.mxu0 0.0
  %236 = vmatpush1.xpose.msra.mxu0 0.0
  %237 = vmatprep.subr.mxu0 0.0
  %238 = vmatpush1.xpose.msra.mxu0 0.0
  %239 = vmatprep.subr.mxu0 0.0
  %240 = vmatpush1.xpose.msra.mxu0 0.0
  %241 = vmatprep.subr.mxu0 0.0
  %242 = vmatpush1.xpose.msra.mxu0 0.0
  %243 = vmatprep.subr.mxu0 0.0
  %244 = vmatpush1.xpose.msra.mxu0 0.0
  %245 = vmatprep.subr.mxu0 0.0
  %246 = vmatpush1.xpose.msra.mxu0 0.0
  %247 = vmatprep.subr.mxu0 0.0
  %248 = vmatpush1.xpose.msra.mxu0 0.0
  %249 = vmatprep.subr.mxu0 0.0
  %250 = vmatpush1.xpose.msra.mxu0 0.0
  %251 = vmatprep.subr.mxu0 0.0
  %252 = vmatpush1.xpose.msra.mxu0 0.0
  %253 = vmatprep.subr.mxu0 %v73
  %254 = vmatpush1.xpose.msra.mxu0 %v65
  %255 = vmatprep.subr.mxu0 0.0
  %256 = vmatpush2.xpose.msra.mxu0 0.0
  %257 = vmatprep.subr.mxu0 0.0
  %258 = vmatpush2.xpose.msra.mxu0 0.0
  %259 = vmatprep.subr.mxu0 0.0
  %260 = vmatpush2.xpose.msra.mxu0 0.0
  %261 = vmatprep.subr.mxu0 0.0
  %262 = vmatpush2.xpose.msra.mxu0 0.0
  %263 = vmatprep.subr.mxu0 0.0
  %264 = vmatpush2.xpose.msra.mxu0 0.0
  %265 = vmatprep.subr.mxu0 0.0
  %266 = vmatpush2.xpose.msra.mxu0 0.0
  %267 = vmatprep.subr.mxu0 0.0
  %268 = vmatpush2.xpose.msra.mxu0 0.0
  %269 = vmatprep.subr.mxu0 0.0
  %270 = vmatpush2.xpose.msra.mxu0 0.0
  %271 = vmatprep.subr.mxu0 0.0
  %272 = vmatpush2.xpose.msra.mxu0 0.0
  %273 = vmatprep.subr.mxu0 0.0
  %274 = vmatpush2.xpose.msra.mxu0 0.0
  %275 = vmatprep.subr.mxu0 0.0
  %276 = vmatpush2.xpose.msra.mxu0 0.0
  %277 = vmatprep.subr.mxu0 0.0
  %278 = vmatpush2.xpose.msra.mxu0 0.0
  %279 = vmatprep.subr.mxu0 0.0
  %280 = vmatpush2.xpose.msra.mxu0 0.0
  %281 = vmatprep.subr.mxu0 0.0
  %282 = vmatpush2.xpose.msra.mxu0 0.0
  %283 = vmatprep.subr.mxu0 0.0
  %284 = vmatpush2.xpose.msra.mxu0 0.0
  %285 = vmatprep.subr.mxu0 0.0
  %286 = vmatpush2.xpose.msra.mxu0 0.0
  %287 = vmatprep.mubr.f32.mxu0 %v73
  %288 = vmatmul.mubr.f32.gmra.mxu0 %v65
  %v289 = vpop.f32.mrf.mxu0
  %v290 = vadd.f32 %v220, %v289
  %v291 = vpop.f32.mrf.mxu0
  %292 = vdwg.mxu0
  %293 = vmatprep.subr.mxu0 0.0
  %294 = vmatpush1.xpose.msra.mxu0 0.0
  %295 = vmatprep.subr.mxu0 0.0
  %296 = vmatpush1.xpose.msra.mxu0 0.0
  %297 = vmatprep.subr.mxu0 0.0
  %298 = vmatpush1.xpose.msra.mxu0 0.0
  %299 = vmatprep.subr.mxu0 0.0
  %300 = vmatpush1.xpose.msra.mxu0 0.0
  %301 = vmatprep.subr.mxu0 0.0
  %302 = vmatpush1.xpose.msra.mxu0 0.0
  %303 = vmatprep.subr.mxu0 0.0
  %304 = vmatpush1.xpose.msra.mxu0 0.0
  %305 = vmatprep.subr.mxu0 0.0
  %306 = vmatpush1.xpose.msra.mxu0 0.0
  %307 = vmatprep.subr.mxu0 0.0
  %308 = vmatpush1.xpose.msra.mxu0 0.0
  %309 = vmatprep.subr.mxu0 0.0
  %310 = vmatpush1.xpose.msra.mxu0 0.0
  %311 = vmatprep.subr.mxu0 0.0
  %312 = vmatpush1.xpose.msra.mxu0 0.0
  %313 = vmatprep.subr.mxu0 0.0
  %314 = vmatpush1.xpose.msra.mxu0 0.0
  %315 = vmatprep.subr.mxu0 0.0
  %316 = vmatpush1.xpose.msra.mxu0 0.0
  %317 = vmatprep.subr.mxu0 0.0
  %318 = vmatpush1.xpose.msra.mxu0 0.0
  %319 = vmatprep.subr.mxu0 0.0
  %320 = vmatpush1.xpose.msra.mxu0 0.0
  %321 = vmatprep.subr.mxu0 0.0
  %322 = vmatpush1.xpose.msra.mxu0 0.0
  %323 = vmatprep.subr.mxu0 %v74
  %324 = vmatpush1.xpose.msra.mxu0 %v72
  %325 = vmatprep.subr.mxu0 0.0
  %326 = vmatpush2.xpose.msra.mxu0 0.0
  %327 = vmatprep.subr.mxu0 0.0
  %328 = vmatpush2.xpose.msra.mxu0 0.0
  %329 = vmatprep.subr.mxu0 0.0
  %330 = vmatpush2.xpose.msra.mxu0 0.0
  %331 = vmatprep.subr.mxu0 0.0
  %332 = vmatpush2.xpose.msra.mxu0 0.0
  %333 = vmatprep.subr.mxu0 0.0
  %334 = vmatpush2.xpose.msra.mxu0 0.0
  %335 = vmatprep.subr.mxu0 0.0
  %336 = vmatpush2.xpose.msra.mxu0 0.0
  %337 = vmatprep.subr.mxu0 0.0
  %338 = vmatpush2.xpose.msra.mxu0 0.0
  %339 = vmatprep.subr.mxu0 0.0
  %340 = vmatpush2.xpose.msra.mxu0 0.0
  %341 = vmatprep.subr.mxu0 0.0
  %342 = vmatpush2.xpose.msra.mxu0 0.0
  %343 = vmatprep.subr.mxu0 0.0
  %344 = vmatpush2.xpose.msra.mxu0 0.0
  %345 = vmatprep.subr.mxu0 0.0
  %346 = vmatpush2.xpose.msra.mxu0 0.0
  %347 = vmatprep.subr.mxu0 0.0
  %348 = vmatpush2.xpose.msra.mxu0 0.0
  %349 = vmatprep.subr.mxu0 0.0
  %350 = vmatpush2.xpose.msra.mxu0 0.0
  %351 = vmatprep.subr.mxu0 0.0
  %352 = vmatpush2.xpose.msra.mxu0 0.0
  %353 = vmatprep.subr.mxu0 0.0
  %354 = vmatpush2.xpose.msra.mxu0 0.0
  %355 = vmatprep.subr.mxu0 0.0
  %356 = vmatpush2.xpose.msra.mxu0 0.0
  %357 = vmatprep.mubr.f32.mxu0 %v74
  %358 = vmatmul.mubr.f32.gmra.mxu0 %v72
  %v359 = vpop.f32.mrf.mxu0
  %v360 = vadd.f32 %v290, %v359
  %v361 = vpop.f32.mrf.mxu0
  %362 = vdwg.mxu0
  %v363 = vadd.f32 %v38, %v360
  %vm364 = vcmask 9216
  %365 = vst.msk [vmem:[%s1] sm:$0x3] %vm364, %v363
  // Predicated region
  $region10: #{_diff_loss_impl.2} parent=0 // pred_check
    _
  $region11: #{_diff_loss_impl.2} parent=0 // pred_check_branch
    %367 = sbr.rel (0) target = $region13
  $region12: #{_diff_loss_impl.2} parent=0 // pred_region
    _
  $region13: #{_diff_loss_impl.2} parent=0 // pred_fallthru
    _
  // Predicated region
  $region14: #{_diff_loss_impl.2} parent=0 // pred_check
    _
  $region15: #{_diff_loss_impl.2} parent=0 // pred_check_branch
    %369 = sbr.rel (0) target = $region17
  $region16: #{_diff_loss_impl.2} parent=0 // pred_region
    _
  $region17: #{_diff_loss_impl.2} parent=0 // pred_fallthru
    _

</llo_original>
